<compile_context>
chip_gen: v7x
topology: tpu7x:2x2x1
jax: 0.10.0
libtpu: 0.0.40
codegen_flags: <defaults>
</compile_context>

<pallas_src>
import functools
import re

import jax
import jax.numpy as jnp
from jax.experimental import pallas as pl
from jax.experimental.pallas import tpu as pltpu


def ce_kernel(pred_ref, gt_ref, out_ref, acc_ref, *,
              total_n, tile_n, tiles_per_core, compute_dtype):
    c = pl.program_id(0)          # core-split axis ("parallel")
    i = pl.program_id(1)          # reduction axis over batch tiles ("arbitrary")

    @pl.when(i == 0)
    def _():
        acc_ref[...] = jnp.zeros_like(acc_ref)

    x = pred_ref[...]                                      # (TN, C)
    if x.dtype != compute_dtype:
        x = x.astype(compute_dtype)                        # f32 upcast only when needed
    gt = gt_ref[...]                                       # (TN, 1) int32

    # Numerically-stable logsumexp pieces; elementwise work stays in
    # compute_dtype (bf16 on v6e/v7x), reductions accumulate in f32.
    m = jnp.max(x, axis=-1, keepdims=True)                 # (TN, 1)
    sumexp = jnp.sum(jnp.exp(x - m), axis=-1, keepdims=True,
                     dtype=jnp.float32)                    # (TN, 1) f32

    # Gather x[n, gt[n]] via a (1, C) lane iota broadcast against gt
    # (one exact match per row).  Pick the raw logits, not the shifted tensor.
    classes = jax.lax.broadcasted_iota(jnp.int32, (1, x.shape[-1]), 1)
    picked = jnp.sum(jnp.where(classes == gt, x, jnp.zeros_like(x)),
                     axis=-1, keepdims=True, dtype=jnp.float32)   # (TN, 1) f32

    # nll = logsumexp - x[gt] = (log(sumexp) + m) - picked
    nll = jnp.log(sumexp) + m.astype(jnp.float32) - picked        # (TN, 1) f32

    # Mask rows past the true batch size (partial boundary blocks hold garbage
    # rows; clamped extra tiles are fully masked).
    row_in_tile = jax.lax.broadcasted_iota(jnp.int32, (tile_n, 1), 0)
    global_row = (c * tiles_per_core + i) * tile_n + row_in_tile
    partial = jnp.sum(jnp.where(global_row < total_n, nll, 0.0))  # scalar f32

    acc_ref[...] = acc_ref[...] + partial

    @pl.when(i == pl.num_programs(1) - 1)
    def _():
        # Fill the whole aligned (8,128) tile -> unmasked lane-dense store.
        out_ref[...] = jnp.broadcast_to(acc_ref[...], out_ref.shape)


def _tpu_generation():
    """Best-effort TPU generation from device_kind; 0 if unknown."""
    try:
        kind = jax.devices()[0].device_kind.lower()
    except Exception:
        return 0
    m = re.search(r"v(\d+)", kind) or re.search(r"tpu\s*(\d+)", kind)
    return int(m.group(1)) if m else 0


def _pick_tile_n(n, c, in_itemsize, target_bytes, vmem_limit):
    """Largest batch-tile (multiple of 8) within the per-buffer logits budget
    and (roughly) within the scoped-VMEM working-set budget."""
    tn = max(8, min(1024, target_bytes // max(1, c * in_itemsize)))
    tn = max(8, (tn // 8) * 8)
    # Rough per-row working set: 2x double-buffered input row + ~4 tile-sized
    # f32 intermediates.  Keep the tile comfortably under the vmem limit.
    per_row = c * (2 * in_itemsize + 16)
    budget_rows = max(8, int((0.6 * vmem_limit) // max(1, per_row)))
    tn = min(tn, max(8, (budget_rows // 8) * 8))
    n_pad8 = ((n + 7) // 8) * 8
    return min(tn, max(8, n_pad8))


def cross_entropy(pred, gt, *, tile_n=None, num_cores=None, compute_dtype=None):
    """pred: (N, C) float logits; gt: (N,) int class indices -> scalar f32."""
    N, C = pred.shape
    in_itemsize = jnp.dtype(pred.dtype).itemsize
    gen = _tpu_generation()

    # Elementwise compute dtype: keep bf16 on chips with bf16 VPU/EUP.
    if compute_dtype is None:
        if pred.dtype == jnp.bfloat16 and gen >= 6:
            compute_dtype = jnp.bfloat16
        else:
            compute_dtype = jnp.float32
    compute_dtype = jnp.dtype(compute_dtype)

    # Per-generation tiling / VMEM / core-split defaults.
    if gen >= 7:            # v7x: 64 MiB VMEM, 2 TC/chip
        target_bytes, vmem_limit, default_cores = 2 << 20, 32 << 20, 2
    elif gen in (5, 6):     # v5e/v6e: 128 MiB VMEM, 1 TC/chip
        target_bytes, vmem_limit, default_cores = 8 << 20, 96 << 20, 1
    else:                   # unknown: conservative
        target_bytes, vmem_limit, default_cores = 4 << 20, 32 << 20, 1
    if num_cores is None:
        num_cores = default_cores

    if tile_n is None:
        tile_n = _pick_tile_n(N, C, in_itemsize, target_bytes, vmem_limit)
    tile_n = max(8, (int(tile_n) // 8) * 8)

    num_tiles = pl.cdiv(N, tile_n)
    ncores = max(1, min(int(num_cores), num_tiles))
    tiles_per_core = pl.cdiv(num_tiles, ncores)
    last_blk = num_tiles - 1

    # Only gt gets reshaped (cheap, N int32); pred is streamed as-is, the last
    # block is a partial block and logically-extra tiles clamp onto it.
    gt2d = gt.reshape(N, 1).astype(jnp.int32)

    def blk_map(c, i):
        return (jnp.minimum(c * tiles_per_core + i, last_blk), 0)

    kernel = functools.partial(
        ce_kernel, total_n=N, tile_n=tile_n, tiles_per_core=tiles_per_core,
        compute_dtype=compute_dtype)

    cost = pl.CostEstimate(
        flops=8 * N * C,                    # max/sub/cmp/select + 2 reductions
        transcendentals=N * C,
        bytes_accessed=N * C * in_itemsize + N * 4 + ncores * 8 * 128 * 4,
    )

    out = pl.pallas_call(
        kernel,
        out_shape=jax.ShapeDtypeStruct((ncores, 8, 128), jnp.float32),
        grid_spec=pltpu.PrefetchScalarGridSpec(
            num_scalar_prefetch=0,
            grid=(ncores, tiles_per_core),
            in_specs=[
                pl.BlockSpec((tile_n, C), blk_map),
                pl.BlockSpec((tile_n, 1), blk_map),
            ],
            out_specs=pl.BlockSpec((1, 8, 128), lambda c, i: (c, 0, 0)),
            scratch_shapes=[pltpu.VMEM((1, 1), jnp.float32)],
        ),
        compiler_params=pltpu.CompilerParams(
            dimension_semantics=("parallel", "arbitrary"),
            vmem_limit_bytes=vmem_limit,
        ),
        cost_estimate=cost,
    )(pred, gt2d)

    # Tiny final reduction (<= ncores partial sums) + single divide by true N.
    return jnp.sum(out[:, 0, 0]) / jnp.float32(N)


def cross_entropy_ref(pred, gt):
    logp = jax.nn.log_softmax(pred.astype(jnp.float32), axis=-1)
    return -jnp.mean(jnp.take_along_axis(logp, gt[:, None], axis=-1))


if __name__ == "__main__":
    key = jax.random.PRNGKey(0)
    k1, k2 = jax.random.split(key)
    N, C = 20, 32  # small, ragged batch to exercise partial blocks / masking
    pred = jax.random.normal(k1, (N, C), dtype=jnp.float32)
    gt = jax.random.randint(k2, (N,), 0, C, dtype=jnp.int32)

    ref = cross_entropy_ref(pred, gt)

    # Default path: auto tile size / core count for this chip generation.
    loss_default = cross_entropy(pred, gt)
    jax.block_until_ready(loss_default)
    assert jnp.allclose(loss_default, ref, rtol=1e-5, atol=1e-5), (loss_default, ref)

    # Forced multi-tile / 2-way core-split path: exercises the accumulator,
    # the clamped extra tile, the ragged partial last block, and the mask.
    loss_tiled = cross_entropy(pred, gt, tile_n=8, num_cores=2)
    jax.block_until_ready(loss_tiled)
    assert jnp.allclose(loss_tiled, ref, rtol=1e-5, atol=1e-5), (loss_tiled, ref)

    # bf16 input path (bf16 elementwise compute on v6e/v7x, f32 elsewhere);
    # reference is computed in f32 on the same bf16-cast logits.
    pred_bf16 = pred.astype(jnp.bfloat16)
    ref_bf16 = cross_entropy_ref(pred_bf16, gt)
    loss_bf16 = cross_entropy(pred_bf16, gt)
    jax.block_until_ready(loss_bf16)
    assert jnp.allclose(loss_bf16, ref_bf16, rtol=5e-2, atol=5e-2), (loss_bf16, ref_bf16)

    print("KERNEL_OK")
</pallas_src>

<mosaic_0001>
module attributes {stable_mosaic.version = 11 : i64} {
  func.func @ce_kernel(%arg0: i32, %arg1: i32, %arg2: memref<24x32xf32, #tpu.memory_space<vmem>>, %arg3: memref<24x1xi32, #tpu.memory_space<vmem>>, %arg4: memref<1x8x128xf32, #tpu.memory_space<vmem>>, %arg5: memref<1x1xf32, #tpu.memory_space<vmem>>) attributes {dimension_semantics = [#tpu.dimension_semantics<parallel>, #tpu.dimension_semantics<arbitrary>], iteration_bounds = array<i64: 1, 1>, scalar_prefetch = 0 : i64, scratch_operands = 1 : i64, tpu.core_type = #tpu.core_type<tc>, window_params = [{transform_indices = @transform_0, window_bounds = array<i64: 24, 32>}, {transform_indices = @transform_1, window_bounds = array<i64: 24, 1>}, {transform_indices = @transform_2, window_bounds = array<i64: 1, 8, 128>}]} {
    %c0_i32 = arith.constant 0 : i32
    %0 = arith.cmpi eq, %arg1, %c0_i32 : i32
    %1 = arith.extui %0 : i1 to i32
    %c0_i32_0 = arith.constant 0 : i32
    %2 = arith.cmpi ne, %1, %c0_i32_0 : i32
    scf.if %2 {
      %cst_15 = arith.constant 0.000000e+00 : f32
      %44 = vector.broadcast %cst_15 : f32 to vector<1x1xf32>
      %c0_16 = arith.constant 0 : index
      %c0_17 = arith.constant 0 : index
      %45 = vector.load %arg5[%c0_16, %c0_17] : memref<1x1xf32, #tpu.memory_space<vmem>>, vector<1x1xf32>
      tpu.vector_store %arg5[%c0_16, %c0_17], %44 {strides = array<i32>} : memref<1x1xf32, #tpu.memory_space<vmem>>, vector<1x1xf32>,
    } else {
    }
    %c0 = arith.constant 0 : index
    %c0_1 = arith.constant 0 : index
    %3 = vector.load %arg2[%c0, %c0_1] : memref<24x32xf32, #tpu.memory_space<vmem>>, vector<24x32xf32>
    %c0_2 = arith.constant 0 : index
    %c0_3 = arith.constant 0 : index
    %4 = vector.load %arg3[%c0_2, %c0_3] : memref<24x1xi32, #tpu.memory_space<vmem>>, vector<24x1xi32>
    %cst = arith.constant dense<0xFF800000> : vector<24xf32>
    %5 = vector.multi_reduction <maximumf>, %3, %cst [1] : vector<24x32xf32> to vector<24xf32>
    %6 = vector.shape_cast %5 : vector<24xf32> to vector<24x1xf32>
    %7 = vector.broadcast %6 : vector<24x1xf32> to vector<24x32xf32>
    %8 = arith.subf %3, %7 : vector<24x32xf32>
    %9 = math.exp %8 : vector<24x32xf32>
    %cst_4 = arith.constant dense<0.000000e+00> : vector<24xf32>
    %10 = vector.multi_reduction <add>, %9, %cst_4 [1] : vector<24x32xf32> to vector<24xf32>
    %11 = vector.shape_cast %10 : vector<24xf32> to vector<24x1xf32>
    %12 = tpu.iota {dimensions = array<i32: 1>} : vector<1x32xi32>
    %13 = vector.broadcast %12 : vector<1x32xi32> to vector<24x32xi32>
    %14 = vector.broadcast %4 : vector<24x1xi32> to vector<24x32xi32>
    %15 = arith.cmpi eq, %13, %14 : vector<24x32xi32>
    %cst_5 = arith.constant 0.000000e+00 : f32
    %16 = vector.broadcast %cst_5 : f32 to vector<24x32xf32>
    %17 = arith.select %15, %3, %16 : vector<24x32xi1>, vector<24x32xf32>
    %cst_6 = arith.constant dense<0.000000e+00> : vector<24xf32>
    %18 = vector.multi_reduction <add>, %17, %cst_6 [1] : vector<24x32xf32> to vector<24xf32>
    %19 = vector.shape_cast %18 : vector<24xf32> to vector<24x1xf32>
    %20 = math.log %11 : vector<24x1xf32>
    %21 = arith.addf %20, %6 : vector<24x1xf32>
    %22 = arith.subf %21, %19 : vector<24x1xf32>
    %23 = tpu.iota {dimensions = array<i32: 0>} : vector<24x1xi32>
    %c1_i32 = arith.constant 1 : i32
    %24 = arith.muli %arg0, %c1_i32 : i32
    %25 = arith.addi %24, %arg1 : i32
    %c24_i32 = arith.constant 24 : i32
    %26 = arith.muli %25, %c24_i32 : i32
    %27 = vector.broadcast %26 : i32 to vector<24x1xi32>
    %28 = arith.addi %27, %23 : vector<24x1xi32>
    %c20_i32 = arith.constant 20 : i32
    %29 = vector.broadcast %c20_i32 : i32 to vector<24x1xi32>
    %30 = arith.cmpi slt, %28, %29 : vector<24x1xi32>
    %cst_7 = arith.constant 0.000000e+00 : f32
    %31 = vector.broadcast %cst_7 : f32 to vector<24x1xf32>
    %32 = arith.select %30, %22, %31 : vector<24x1xi1>, vector<24x1xf32>
    %33 = vector.shape_cast %32 : vector<24x1xf32> to vector<1x24x1xf32>
    %cst_8 = arith.constant dense<0.000000e+00> : vector<1xf32>
    %34 = vector.multi_reduction <add>, %33, %cst_8 [1, 2] : vector<1x24x1xf32> to vector<1xf32>
    %35 = vector.shape_cast %34 : vector<1xf32> to vector<1x1x1xf32>
    %36 = vector.extract %35[0, 0, 0] : f32 from vector<1x1x1xf32>
    %c0_9 = arith.constant 0 : index
    %c0_10 = arith.constant 0 : index
    %37 = vector.load %arg5[%c0_9, %c0_10] : memref<1x1xf32, #tpu.memory_space<vmem>>, vector<1x1xf32>
    %38 = vector.broadcast %36 : f32 to vector<1x1xf32>
    %39 = arith.addf %37, %38 : vector<1x1xf32>
    %c0_11 = arith.constant 0 : index
    %c0_12 = arith.constant 0 : index
    %40 = vector.load %arg5[%c0_11, %c0_12] : memref<1x1xf32, #tpu.memory_space<vmem>>, vector<1x1xf32>
    tpu.vector_store %arg5[%c0_11, %c0_12], %39 {strides = array<i32>} : memref<1x1xf32, #tpu.memory_space<vmem>>, vector<1x1xf32>,
    %c0_i32_13 = arith.constant 0 : i32
    %41 = arith.cmpi eq, %arg1, %c0_i32_13 : i32
    %42 = arith.extui %41 : i1 to i32
    %c0_i32_14 = arith.constant 0 : i32
    %43 = arith.cmpi ne, %42, %c0_i32_14 : i32
    scf.if %43 {
      %c0_15 = arith.constant 0 : index
      %c0_16 = arith.constant 0 : index
      %44 = vector.load %arg5[%c0_15, %c0_16] : memref<1x1xf32, #tpu.memory_space<vmem>>, vector<1x1xf32>
      %45 = vector.shape_cast %44 : vector<1x1xf32> to vector<1x1x1xf32>
      %46 = vector.broadcast %45 : vector<1x1x1xf32> to vector<1x8x128xf32>
      %c0_17 = arith.constant 0 : index
      %c0_18 = arith.constant 0 : index
      %c0_19 = arith.constant 0 : index
      %47 = vector.load %arg4[%c0_17, %c0_18, %c0_19] : memref<1x8x128xf32, #tpu.memory_space<vmem>>, vector<1x8x128xf32>
      tpu.vector_store %arg4[%c0_17, %c0_18, %c0_19], %46 {strides = array<i32>} : memref<1x8x128xf32, #tpu.memory_space<vmem>>, vector<1x8x128xf32>,
    } else {
    }
    return
  }
  func.func @transform_0(%arg0: i32, %arg1: i32) -> (i32, i32) {
    %c1_i32 = arith.constant 1 : i32
    %0 = arith.muli %arg0, %c1_i32 : i32
    %1 = arith.addi %0, %arg1 : i32
    %c0_i32 = arith.constant 0 : i32
    %2 = arith.minsi %1, %c0_i32 : i32
    %c0_i32_0 = arith.constant 0 : i32
    %c0_i32_1 = arith.constant 0 : i32
    return %2, %c0_i32_0 : i32, i32
  }
  func.func @transform_1(%arg0: i32, %arg1: i32) -> (i32, i32) {
    %c1_i32 = arith.constant 1 : i32
    %0 = arith.muli %arg0, %c1_i32 : i32
    %1 = arith.addi %0, %arg1 : i32
    %c0_i32 = arith.constant 0 : i32
    %2 = arith.minsi %1, %c0_i32 : i32
    %c0_i32_0 = arith.constant 0 : i32
    %c0_i32_1 = arith.constant 0 : i32
    return %2, %c0_i32_0 : i32, i32
  }
  func.func @transform_2(%arg0: i32, %arg1: i32) -> (i32, i32, i32) {
    %c0_i32 = arith.constant 0 : i32
    %c0_i32_0 = arith.constant 0 : i32
    %c0_i32_1 = arith.constant 0 : i32
    return %arg0, %c0_i32, %c0_i32_0 : i32, i32, i32
  }
}

</mosaic_0001>

<llo_original>
// kernel: tpu_custom_call.1
$region0: #{tpu_custom_call.1}
  #allocation0 [shape = 'u32[]', space=smem, size = 0x4, offset = 0x4, fixed_abs, tag = 'smem constant byte address 0x4 - core index']
  #allocation1 [shape = 'u32[144,128]{1,0:T(1,128)}', space=vmem, size = 0x12000, scoped, tag = 'internal scratch']
  #allocation2 [shape = 'f32[1,1]{1,0:T(1,128)}', space=vmem, size = 0x200, scoped, tag = 'scratch operand']
  %s0 = inlined_call_operand.vmem [shape: f32[20,32], index: 0, kind: input, shape index: {}]
  %s1 = inlined_call_operand.vmem [shape: s32[20,1], index: 1, kind: input, shape index: {}]
  %s2 = inlined_call_operand.hbm [shape: f32[1,8,128], index: 2, kind: output, shape index: {}]
  %s3 = sld [smem:[#allocation0]]
  $region26: #{tpu_custom_call.1} parent=0
    _
  %s5 = ssub.s32 1, %s3
  %s6 = scalar_select 0, %s5, %s3
  $region1: #{tpu_custom_call.1} parent=0
    #allocation3 [shape = 'u8[4096]{0}', space=vmem, size = 0x1000, scoped, tag = 'output window, operand 0, single buffered']
    #allocation4 [shape = 's32[1]{0}', space=sflag, size = 0x4, scoped, tag = 'scoped memory for tpu_custom_call.1']
    %7 = vsyncpa [#allocation4], 0
    // Predicated region
    $region2: #{tpu_custom_call.1} parent=1 // pred_check
      _
    $region3: #{tpu_custom_call.1} parent=1 // pred_check_branch
      %9 = sbr.rel (0) target = $region5
    $region4: #{tpu_custom_call.1} parent=1 // pred_region
      %s10 = sadd.s32 0, 0
      %p11 = scmp.lt.s32.totalorder %s10, 0
      %s12 = scalar_select %p11, %s10, 0
      %s13 = smul.u32 3, %s12
      %p14 = scmp.lt.s32.totalorder %s13, 2
      %s15 = scalar_select %p14, %s13, 2
      %s16 = smul.addr %s15, 8
      %s17 = scalar_lea.vmem %s0, %s16
      %s18 = sadd.s32 0, 0
      %p19 = scmp.lt.s32.totalorder %s18, 0
      %s20 = scalar_select %p19, %s18, 0
      %s21 = smul.u32 3, %s20
    $region5: #{tpu_custom_call.1} parent=1 // pred_fallthru
      _
    // Predicated region
    $region6: #{tpu_custom_call.1} parent=1 // pred_check
      _
    $region7: #{tpu_custom_call.1} parent=1 // pred_check_branch
      %23 = sbr.rel (0) target = $region9
    $region8: #{tpu_custom_call.1} parent=1 // pred_region
      %s24 = sadd.s32 0, 0
      %p25 = scmp.lt.s32.totalorder %s24, 0
      %s26 = scalar_select %p25, %s24, 0
      %s27 = smul.u32 3, %s26
      %p28 = scmp.lt.s32.totalorder %s27, 2
      %s29 = scalar_select %p28, %s27, 2
      %s30 = smul.addr %s29, 8
      %s31 = scalar_lea.vmem %s1, %s30
      %s32 = sadd.s32 0, 0
      %p33 = scmp.lt.s32.totalorder %s32, 0
      %s34 = scalar_select %p33, %s32, 0
      %s35 = smul.u32 3, %s34
    $region9: #{tpu_custom_call.1} parent=1 // pred_fallthru
      _
    %s36 = sadd.s32 0, 0
    %p37 = scmp.lt.s32.totalorder %s36, 0
    %s38 = scalar_select %p37, %s36, 0
    %s39 = smul.u32 3, %s38
    %p40 = scmp.lt.s32.totalorder %s39, 2
    %s41 = scalar_select %p40, %s39, 2
    %s42 = smul.addr %s41, 8
    %s43 = scalar_lea.vmem %s0, %s42
    %s44 = sadd.s32 0, 0
    %p45 = scmp.lt.s32.totalorder %s44, 0
    %s46 = scalar_select %p45, %s44, 0
    %s47 = smul.u32 3, %s46
    %p48 = scmp.lt.s32.totalorder %s47, 2
    %s49 = scalar_select %p48, %s47, 2
    %s50 = smul.addr %s49, 8
    %s51 = scalar_lea.vmem %s1, %s50
    %s52 = sadd.s32 0, 0
    %p53 = scmp.lt.s32.totalorder %s52, 0
    %s54 = scalar_select %p53, %s52, 0
    %s55 = smul.u32 3, %s54
    %p56 = scmp.lt.s32.totalorder %s55, 2
    %s57 = scalar_select %p56, %s55, 2
    %s58 = smul.addr %s57, 8
    %s59 = scalar_lea.vmem %s0, %s58
    %s60 = sadd.s32 0, 0
    %p61 = scmp.lt.s32.totalorder %s60, 0
    %s62 = scalar_select %p61, %s60, 0
    %s63 = smul.u32 3, %s62
    %s64 = sadd.s32 0, 0
    %p65 = scmp.lt.s32.totalorder %s64, 0
    %s66 = scalar_select %p65, %s64, 0
    %s67 = smul.u32 3, %s66
    %p68 = scmp.lt.s32.totalorder %s67, 2
    %s69 = scalar_select %p68, %s67, 2
    %s70 = smul.addr %s69, 8
    %s71 = scalar_lea.vmem %s1, %s70
    %s72 = sadd.s32 0, 0
    %p73 = scmp.lt.s32.totalorder %s72, 0
    %s74 = scalar_select %p73, %s72, 0
    %s75 = smul.u32 3, %s74
    %p76 = scmp.eq.s32.totalorder 0, 0
    // Predicated region
    $region10: #{tpu_custom_call.1} parent=1 // pred_check
      %p77 = pneg %p76
    $region11: #{tpu_custom_call.1} parent=1 // pred_check_branch
      %79 = sbr.rel (%p77) target = $region13
    $region12: #{tpu_custom_call.1} parent=1 // pred_region
      %vm80 = vcmask 0
      %81 = vst.msk [vmem:[#allocation2] sm:$0x1] %vm80, 0.0
    $region13: #{tpu_custom_call.1} parent=1 // pred_fallthru
      _
    %v82 = vld [vmem:[%s59] sm:$0xff]
    %v83 = vld [vmem:[%s59 + $0x8] sm:$0xff]
    %v84 = vld [vmem:[%s59 + $0x10] sm:$0xff]
    %v85 = vld [vmem:[%s71] sm:$0xff]
    %v86 = vld [vmem:[%s71 + $0x8] sm:$0xff]
    %v87 = vld [vmem:[%s71 + $0x10] sm:$0xff]
    %vm88 = vcmask 261120
    %v89 = vsel %vm88, %v82, -inf
    %90 = vmax.xlane.f32.xlu0 %v89
    %v91 = vpop.xlane.xlu0 %90
    %v92 = vsel %vm88, %v83, -inf
    %93 = vmax.xlane.f32.xlu0 %v92
    %v94 = vpop.xlane.xlu0 %93
    %v95 = vsel %vm88, %v84, -inf
    %96 = vmax.xlane.f32.xlu0 %v95
    %v97 = vpop.xlane.xlu0 %96
    %v98 = vsub.f32 %v82, %v91
    %v99 = vsub.f32 %v83, %v94
    %v100 = vsub.f32 %v84, %v97
    %v101 = vmul.f32 %v98, 1.442695
    %v102 = vpow.pop %v101
    %v103 = vmul.f32 %v99, 1.442695
    %v104 = vpow.pop %v103
    %v105 = vmul.f32 %v100, 1.442695
    %v106 = vpow.pop %v105
    %v107 = vsel %vm88, %v102, 0.0
    %108 = vadd.xlane.f32.xlu0 %v107
    %v109 = vpop.xlane.xlu0 %108
    %v110 = vsel %vm88, %v104, 0.0
    %111 = vadd.xlane.f32.xlu0 %v110
    %v112 = vpop.xlane.xlu0 %111
    %v113 = vsel %vm88, %v106, 0.0
    %114 = vadd.xlane.f32.xlu0 %v113
    %v115 = vpop.xlane.xlu0 %114
    %v116 = vlaneseq
    %v117 = vand.u32 %v116, 127
    %118 = vset.pattern.permute.xlu0 0
    %119 = vperm.xlu0 %118, %v85
    %v120 = vpop.permute.xlu0 %119
    %121 = vset.pattern.permute.xlu0 0
    %122 = vperm.xlu0 %121, %v86
    %v123 = vpop.permute.xlu0 %122
    %124 = vset.pattern.permute.xlu0 0
    %125 = vperm.xlu0 %124, %v87
    %v126 = vpop.permute.xlu0 %125
    %vm127 = vcmp.eq.s32.totalorder %v117, %v120
    %vm128 = vcmp.eq.s32.totalorder %v117, %v123
    %vm129 = vcmp.eq.s32.totalorder %v117, %v126
    %v130 = vsel %vm127, %v82, 0.0
    %v131 = vsel %vm128, %v83, 0.0
    %v132 = vsel %vm129, %v84, 0.0
    %v133 = vsel %vm88, %v130, 0.0
    %134 = vadd.xlane.f32.xlu0 %v133
    %v135 = vpop.xlane.xlu0 %134
    %v136 = vsel %vm88, %v131, 0.0
    %137 = vadd.xlane.f32.xlu0 %v136
    %v138 = vpop.xlane.xlu0 %137
    %v139 = vsel %vm88, %v132, 0.0
    %140 = vadd.xlane.f32.xlu0 %v139
    %v141 = vpop.xlane.xlu0 %140
    %v142 = vlog2.pop %v109
    %v143 = vmul.f32 %v142, 0.6931472
    %v144 = vlog2.pop %v112
    %v145 = vmul.f32 %v144, 0.6931472
    %v146 = vlog2.pop %v115
    %v147 = vmul.f32 %v146, 0.6931472
    %v148 = vadd.f32 %v143, %v91
    %v149 = vadd.f32 %v145, %v94
    %v150 = vadd.f32 %v147, %v97
    %v151 = vsub.f32 %v148, %v135
    %v152 = vsub.f32 %v149, %v138
    %v153 = vsub.f32 %v150, %v141
    %v154 = vlaneseq
    %v155 = vshrl.u32 %v154, 7
    %v156 = vadd.s32 %v155, 8
    %v157 = vadd.s32 %v155, 16
    %s158 = sadd.s32 0, 0
    %s159 = smul.u32 %s158, 24
    %v160 = vstv %s159
    %v161 = vadd.s32 %v160, %v155
    %v162 = vadd.s32 %v160, %v156
    %v163 = vadd.s32 %v160, %v157
    %vm164 = vcmp.lt.s32.totalorder %v161, 20
    %vm165 = vcmp.lt.s32.totalorder %v162, 20
    %vm166 = vcmp.lt.s32.totalorder %v163, 20
    %v167 = vsel %vm164, %v151, 0.0
    %v168 = vsel %vm165, %v152, 0.0
    %v169 = vsel %vm166, %v153, 0.0
    %vm170 = vcmask 7168
    %v171 = vsel %vm170, %v167, 0.0
    %v172 = vsel %vm170, %v168, 0.0
    %v173 = vadd.f32 %v171, %v172
    %v174 = vsel %vm170, %v169, 0.0
    %v175 = vadd.f32 %v173, %v174
    %176 = vadd.xlane.f32.xlu0 %v175
    %v177 = vpop.xlane.xlu0 %176
    %v178 = vrot.slane %v177, 4
    %v179 = vadd.f32 %v177, %v178
    %v180 = vrot.slane %v179, 2
    %v181 = vadd.f32 %v179, %v180
    %v182 = vrot.slane %v181, 1
    %v183 = vadd.f32 %v181, %v182
    %s184 = vtos %v183
    %v185 = vld [vmem:[#allocation2] sm:$0x1]
    %v186 = vstv %s184
    %v187 = vadd.f32 %v185, %v186
    %vm188 = vcmask 0
    %189 = vst.msk [vmem:[#allocation2] sm:$0x1] %vm188, %v187
    // Predicated region
    $region14: #{tpu_custom_call.1} parent=1 // pred_check
      %p190 = pneg %p76
    $region15: #{tpu_custom_call.1} parent=1 // pred_check_branch
      %192 = sbr.rel (%p190) target = $region17
    $region16: #{tpu_custom_call.1} parent=1 // pred_region
      %v193 = vld [vmem:[#allocation2] sm:$0x1]
      %v195 = vlaneseq
      %v196 = vshrl.u32 %v195, 7
      %v197 = vsub.s32 0, %v196
      %v198 = vrot.slane %v193, %v197
      %199 = vset.pattern.permute.xlu0 0
      %200 = vperm.xlu0 %199, %v198
      %v201 = vpop.permute.xlu0 %200
      %203 = vst [vmem:[#allocation3] sm:$0xff] %v201
    $region17: #{tpu_custom_call.1} parent=1 // pred_fallthru
      _
    // Predicated region
    $region18: #{tpu_custom_call.1} parent=1 // pred_check
      _
    $region19: #{tpu_custom_call.1} parent=1 // pred_check_branch
      %205 = sbr.rel (0) target = $region21
    $region20: #{tpu_custom_call.1} parent=1 // pred_region
      %s207 = ssub.s32 128, 128
      %208 = vsyncadd [#allocation4], %s207
      %s210 = sshll.u32 [#allocation3], 4
      %s211 = int_to_ptr.vmem [resolvable:$true] %s210
      %213 = dma.vmem_to_hbm [thread:$0]  %s211, 128, %s2, [#allocation4]
    $region21: #{tpu_custom_call.1} parent=1 // pred_fallthru
      _
    // Predicated region
    $region22: #{tpu_custom_call.1} parent=1 // pred_check
      _
    $region23: #{tpu_custom_call.1} parent=1 // pred_check_branch
      %215 = sbr.rel (0) target = $region25
    $region24: #{tpu_custom_call.1} parent=1 // pred_region
      %216 = dma.done [#allocation4], 128
    $region25: #{tpu_custom_call.1} parent=1 // pred_fallthru
      _
    %217 = vsyncpa [#allocation4], 1

</llo_original>
